<compile_context>
chip_gen: v7x
topology: tpu7x:2x2x1
jax: 0.10.0
libtpu: 0.0.40
codegen_flags: <defaults>
</compile_context>

<pallas_src>
import functools

import jax
import jax.numpy as jnp
from jax.experimental import pallas as pl
from jax.experimental.pallas import tpu as pltpu

_EPS = 1e-5

# Original-resolution tap offset per (output parity, kernel tap index) for a
# depthwise 3x3 (pad=1) applied after 2x nearest upsampling:
#   upsampled output row 2h+a, tap ky  reads  original row h + _PAR_OFF[a][ky]
# (same table for columns / kx / parity b).
_PAR_OFF = ((-1, 0, 0), (0, 0, 1))


def _pad_cols(w):
    """Zero margin (in lanes) on each side of the flattened spatial axis."""
    return max(128, ((w + 1 + 127) // 128) * 128)


# ----------------------------------------------------------------------------
# In-kernel helpers
# ----------------------------------------------------------------------------
def _conv1x1_relu(x, w, b):
    """relu(w @ x + b).  x: (Cin, S), w: (Cout, Cin), b: (Cout, 1)."""
    cout, cin = w.shape
    if cin <= 16:
        # Tiny channel counts: unrolled VPU FMAs instead of a matmul whose K/N
        # would light up <4 of the MXU's 128/256 columns (pure MXU latency).
        acc = jnp.zeros((cout, x.shape[1]), jnp.float32)
        for ci in range(cin):
            acc = acc + w[:, ci:ci + 1] * x[ci:ci + 1, :]
    else:
        acc = jnp.dot(w, x, preferred_element_type=jnp.float32)
    return jnp.maximum(acc + b, 0.0)


def _store_padded(pad_ref, y, hw, pad):
    """pad_ref <- [pad zeros | y (row-major flat spatial) | pad zeros]."""
    c = y.shape[0]
    # Zero only the margins (cheap), every step so it stays correct even when
    # the batch grid axis is split across megacore TensorCores.
    pad_ref[:, :pad] = jnp.zeros((c, pad), jnp.float32)
    pad_ref[:, pad + hw:] = jnp.zeros((c, pad), jnp.float32)
    pad_ref[:, pad:pad + hw] = y          # lane-aligned interior store


def _dw_taps(pad_ref, ml, mr, w_dim, hw, pad):
    """The 9 spatially shifted, zero-padded views of the tensor in pad_ref.

    taps[(dr, dc)][c, h*W + w] == y[c, h+dr, w+dc]  (0 outside the image).
    Row over/underflow lands in the zero margins; column wrap-around across row
    boundaries is killed by the precomputed edge masks ml ("w-1 >= 0") and
    mr ("w+1 <= W-1").
    """
    taps = {}
    for dr in (-1, 0, 1):
        for dc in (-1, 0, 1):
            off = dr * w_dim + dc
            t = pad_ref[:, pad + off:pad + off + hw]
            if dc == -1:
                t = t * ml
            elif dc == 1:
                t = t * mr
            taps[(dr, dc)] = t
    return taps


# ----------------------------------------------------------------------------
# Kernels
# ----------------------------------------------------------------------------
def _stride1_kernel(x_ref, ml_ref, mr_ref, w1_ref, b1_ref, wd_ref, bd_ref,
                    w3_ref, b3_ref, o_ref, pad_ref, *, W, cb, pad):
    hw = x_ref.shape[2]
    # branch2 input = upper half of the channels, already lane-dense (cb, H*W).
    x2 = x_ref[0, cb:, :].astype(jnp.float32)

    # conv1x1 + folded BN + ReLU
    y1 = _conv1x1_relu(x2, w1_ref[...], b1_ref[...])

    # depthwise 3x3 (pad=1) + folded BN
    _store_padded(pad_ref, y1, hw, pad)
    taps = _dw_taps(pad_ref, ml_ref[...], mr_ref[...], W, hw, pad)
    wd = wd_ref[...]
    acc = jnp.zeros((cb, hw), jnp.float32)
    for ky in range(3):
        for kx in range(3):
            acc = acc + wd[:, 3 * ky + kx:3 * ky + kx + 1] * taps[(ky - 1, kx - 1)]
    y2 = acc + bd_ref[...]

    # conv1x1 + folded BN + ReLU
    y3 = _conv1x1_relu(y2, w3_ref[...], b3_ref[...])

    # fused torch.cat + channel_shuffle(groups=2):
    #   out[2c] = identity branch (x1_c),  out[2c+1] = conv branch (y3_c)
    for c in range(cb):
        o_ref[0, 2 * c:2 * c + 1, :] = x_ref[0, c:c + 1, :]
        o_ref[0, 2 * c + 1:2 * c + 2, :] = y3[c:c + 1, :].astype(o_ref.dtype)


def _stride2_kernel(x_ref, ml_ref, mr_ref, w1_ref, b1_ref, wd_ref, bd_ref,
                    w3_ref, b3_ref, o_ref, pad_ref, *, W, pad):
    hw = x_ref.shape[2]
    cout = w1_ref.shape[0]
    x = x_ref[0, :, :].astype(jnp.float32)           # (Cin, H*W), ORIGINAL res

    # 1x1 conv commutes with nearest-neighbour upsampling -> run conv1 (+ folded
    # BN + ReLU) at the original resolution; the 2x upsample is never built.
    y1 = _conv1x1_relu(x, w1_ref[...], b1_ref[...])  # (Cout, H*W)

    _store_padded(pad_ref, y1, hw, pad)
    taps = _dw_taps(pad_ref, ml_ref[...], mr_ref[...], W, hw, pad)
    wd = wd_ref[...]
    bd = bd_ref[...]
    w3 = w3_ref[...]
    b3 = b3_ref[...]

    # Depthwise 3x3 over the *virtual* 2x-upsampled y1, decomposed into its 4
    # output parity planes (a, b): up-pixel (2h+a, 2w+b) is a 9-tap combination
    # of y1 taps at the original resolution (offsets given by _PAR_OFF).
    for a in range(2):
        for b in range(2):
            acc = jnp.zeros((cout, hw), jnp.float32)
            for ky in range(3):
                for kx in range(3):
                    tap = taps[(_PAR_OFF[a][ky], _PAR_OFF[b][kx])]
                    acc = acc + wd[:, 3 * ky + kx:3 * ky + kx + 1] * tap
            y2 = acc + bd
            y3 = _conv1x1_relu(y2, w3, b3)           # conv1x1 + BN + ReLU
            o_ref[0, 2 * a + b, :, :] = y3.astype(o_ref.dtype)


# ----------------------------------------------------------------------------
# pallas_call wrappers
# ----------------------------------------------------------------------------
_COMPILER_PARAMS = pltpu.CompilerParams(
    dimension_semantics=("parallel",),        # batch steps are independent
    vmem_limit_bytes=32 * 1024 * 1024,
)


def _weight_specs(cout, cin):
    const = lambda n: (0, 0)
    return [
        pl.BlockSpec((cout, cin), const),     # w1
        pl.BlockSpec((cout, 1), const),       # b1
        pl.BlockSpec((cout, 9), const),       # wd (col = 3*ky + kx)
        pl.BlockSpec((cout, 1), const),       # bd
        pl.BlockSpec((cout, cout), const),    # w3
        pl.BlockSpec((cout, 1), const),       # b3
    ]


def _edge_masks(H, W):
    col = jnp.arange(H * W, dtype=jnp.int32) % W
    ml = (col >= 1).astype(jnp.float32).reshape(1, H * W)      # col w-1 in bounds
    mr = (col <= W - 2).astype(jnp.float32).reshape(1, H * W)  # col w+1 in bounds
    return ml, mr


def _run_stride1(x_flat, H, W, w1, b1, wd, bd, w3, b3):
    N, C, HW = x_flat.shape
    cb = C // 2
    pad = _pad_cols(W)
    ml, mr = _edge_masks(H, W)
    kernel = functools.partial(_stride1_kernel, W=W, cb=cb, pad=pad)
    mask_spec = pl.BlockSpec((1, HW), lambda n: (0, 0))
    return pl.pallas_call(
        kernel,
        out_shape=jax.ShapeDtypeStruct((N, C, HW), x_flat.dtype),
        grid_spec=pltpu.PrefetchScalarGridSpec(
            num_scalar_prefetch=0,
            grid=(N,),
            in_specs=[pl.BlockSpec((1, C, HW), lambda n: (n, 0, 0)),
                      mask_spec, mask_spec] + _weight_specs(cb, cb),
            out_specs=pl.BlockSpec((1, C, HW), lambda n: (n, 0, 0)),
            scratch_shapes=[pltpu.VMEM((cb, HW + 2 * pad), jnp.float32)],
        ),
        compiler_params=_COMPILER_PARAMS,
    )(x_flat, ml, mr, w1, b1, wd, bd, w3, b3)


def _run_stride2(x_flat, H, W, w1, b1, wd, bd, w3, b3):
    N, Cin, HW = x_flat.shape
    Cout = w1.shape[0]
    pad = _pad_cols(W)
    ml, mr = _edge_masks(H, W)
    kernel = functools.partial(_stride2_kernel, W=W, pad=pad)
    mask_spec = pl.BlockSpec((1, HW), lambda n: (0, 0))
    return pl.pallas_call(
        kernel,
        out_shape=jax.ShapeDtypeStruct((N, 4, Cout, HW), x_flat.dtype),
        grid_spec=pltpu.PrefetchScalarGridSpec(
            num_scalar_prefetch=0,
            grid=(N,),
            in_specs=[pl.BlockSpec((1, Cin, HW), lambda n: (n, 0, 0)),
                      mask_spec, mask_spec] + _weight_specs(Cout, Cin),
            out_specs=pl.BlockSpec((1, 4, Cout, HW), lambda n: (n, 0, 0, 0)),
            scratch_shapes=[pltpu.VMEM((Cout, HW + 2 * pad), jnp.float32)],
        ),
        compiler_params=_COMPILER_PARAMS,
    )(x_flat, ml, mr, w1, b1, wd, bd, w3, b3)


# ----------------------------------------------------------------------------
# DecoderResidual forward (NCHW in/out, matching the PyTorch module)
# ----------------------------------------------------------------------------
@jax.jit
def decoder_residual_stride1(x_nchw, params):
    """stride == 1: identity branch + conv branch, channel shuffle fused in-kernel."""
    N, C, H, W = x_nchw.shape
    x_flat = x_nchw.reshape(N, C, H * W)            # free reshape (NCHW contiguous)
    out = _run_stride1(x_flat, H, W, *params)
    return out.reshape(N, C, H, W)


@jax.jit
def decoder_residual_stride2(x_nchw, params):
    """stride != 1: UpsamplingNearest2d(2x) + conv branch; upsample fused into kernel."""
    N, Cin, H, W = x_nchw.shape
    x_flat = x_nchw.reshape(N, Cin, H * W)          # free reshape; NO 2x upsample in HBM
    out4 = _run_stride2(x_flat, H, W, *params)      # (N, 4, Cout, H*W): parity planes
    Cout = out4.shape[2]
    out = out4.reshape(N, 2, 2, Cout, H, W)         # (N, a, b, C, h, w)
    out = jnp.transpose(out, (0, 3, 4, 1, 5, 2))    # (N, C, h, a, w, b)
    return out.reshape(N, Cout, 2 * H, 2 * W)       # row 2h+a, col 2w+b (free merge)


# ----------------------------------------------------------------------------
# Parameter construction (deterministic) + inference-mode BN folding
# ----------------------------------------------------------------------------
def _bn_params(key, c):
    kg, kb, km, kv = jax.random.split(key, 4)
    gamma = 1.0 + 0.1 * jax.random.normal(kg, (c,), jnp.float32)
    beta = 0.1 * jax.random.normal(kb, (c,), jnp.float32)
    mean = 0.1 * jax.random.normal(km, (c,), jnp.float32)
    var = jnp.abs(jax.random.normal(kv, (c,), jnp.float32)) + 0.5
    return gamma, beta, mean, var


def make_branch_params(key, cin, cout):
    """conv1x1(cin->cout)+BN+ReLU, depthwise3x3(cout)+BN, conv1x1(cout->cout)+BN+ReLU,
    with the BNs (inference mode) folded into per-output-channel scale/bias."""
    k1, k2, k3, kb1, kb2, kb3 = jax.random.split(key, 6)
    w1_t = 0.2 * jax.random.normal(k1, (cout, cin), jnp.float32)    # (Cout,Cin,1,1)
    wd_t = 0.2 * jax.random.normal(k2, (cout, 3, 3), jnp.float32)   # (Cout,1,3,3)
    w3_t = 0.2 * jax.random.normal(k3, (cout, cout), jnp.float32)   # (Cout,Cout,1,1)

    g1, be1, m1, v1 = _bn_params(kb1, cout)
    gd, bed, md, vd = _bn_params(kb2, cout)
    g3, be3, m3, v3 = _bn_params(kb3, cout)
    s1 = g1 / jnp.sqrt(v1 + _EPS)
    sd = gd / jnp.sqrt(vd + _EPS)
    s3 = g3 / jnp.sqrt(v3 + _EPS)

    w1 = w1_t * s1[:, None]                          # (Cout, Cin)
    b1 = (be1 - m1 * s1).reshape(cout, 1)
    wd = wd_t.reshape(cout, 9) * sd[:, None]         # (Cout, 9), col = 3*ky+kx
    bd = (bed - md * sd).reshape(cout, 1)
    w3 = w3_t * s3[:, None]                          # (Cout, Cout)
    b3 = (be3 - m3 * s3).reshape(cout, 1)
    return (w1, b1, wd, bd, w3, b3)


# ----------------------------------------------------------------------------
# Pure-JAX reference (same folded params) for correctness checks
# ----------------------------------------------------------------------------
def _ref_branch_nchw(x, w1, b1, wd, bd, w3, b3):
    H, W = x.shape[2], x.shape[3]
    y1 = jnp.maximum(jnp.einsum('oi,nihw->nohw', w1, x) + b1.reshape(1, -1, 1, 1), 0.0)
    yp = jnp.pad(y1, ((0, 0), (0, 0), (1, 1), (1, 1)))
    acc = jnp.zeros_like(y1)
    for ky in range(3):
        for kx in range(3):
            acc = acc + yp[:, :, ky:ky + H, kx:kx + W] * wd[:, 3 * ky + kx].reshape(1, -1, 1, 1)
    y2 = acc + bd.reshape(1, -1, 1, 1)
    return jnp.maximum(jnp.einsum('oi,nihw->nohw', w3, y2) + b3.reshape(1, -1, 1, 1), 0.0)


if __name__ == "__main__":
    key = jax.random.PRNGKey(0)
    kx, kp1, kp2 = jax.random.split(key, 3)

    N, inp, oup, H, W = 2, 8, 8, 16, 16
    cb = oup // 2                                    # branch_features

    x = jax.random.normal(kx, (N, inp, H, W), jnp.float32)

    # --- stride == 1 ---------------------------------------------------------
    params1 = make_branch_params(kp1, cb, cb)
    out1 = decoder_residual_stride1(x, params1)
    jax.block_until_ready(out1)
    assert out1.shape == (N, oup, H, W)
    ref_y = _ref_branch_nchw(x[:, cb:], *params1)
    assert jnp.allclose(out1[:, 0::2], x[:, :cb], rtol=1e-5, atol=1e-6), "identity branch"
    assert jnp.allclose(out1[:, 1::2], ref_y, rtol=1e-4, atol=1e-4), "conv branch (stride 1)"

    # --- stride != 1 ---------------------------------------------------------
    params2 = make_branch_params(kp2, inp, oup)
    out2 = decoder_residual_stride2(x, params2)
    jax.block_until_ready(out2)
    assert out2.shape == (N, oup, 2 * H, 2 * W)
    up = jnp.repeat(jnp.repeat(x, 2, axis=2), 2, axis=3)
    ref2 = _ref_branch_nchw(up, *params2)
    assert jnp.allclose(out2, ref2, rtol=1e-4, atol=1e-4), "conv branch (stride 2)"

    print("KERNEL_OK")
</pallas_src>

<mosaic_0001>
module attributes {stable_mosaic.version = 11 : i64} {
  func.func @_stride1_kernel(%arg0: i32, %arg1: memref<1x8x256xf32, #tpu.memory_space<vmem>>, %arg2: memref<1x256xf32, #tpu.memory_space<vmem>>, %arg3: memref<1x256xf32, #tpu.memory_space<vmem>>, %arg4: memref<4x4xf32, #tpu.memory_space<vmem>>, %arg5: memref<4x1xf32, #tpu.memory_space<vmem>>, %arg6: memref<4x9xf32, #tpu.memory_space<vmem>>, %arg7: memref<4x1xf32, #tpu.memory_space<vmem>>, %arg8: memref<4x4xf32, #tpu.memory_space<vmem>>, %arg9: memref<4x1xf32, #tpu.memory_space<vmem>>, %arg10: memref<1x8x256xf32, #tpu.memory_space<vmem>>, %arg11: memref<4x512xf32, #tpu.memory_space<vmem>>) attributes {dimension_semantics = [#tpu.dimension_semantics<parallel>], iteration_bounds = array<i64: 2>, scalar_prefetch = 0 : i64, scratch_operands = 1 : i64, tpu.core_type = #tpu.core_type<tc>, window_params = [{transform_indices = @transform_0, window_bounds = array<i64: 1, 8, 256>}, {pipeline_mode = #tpu.pipeline_mode<synchronous>, transform_indices = @transform_1, window_bounds = array<i64: 1, 256>}, {pipeline_mode = #tpu.pipeline_mode<synchronous>, transform_indices = @transform_2, window_bounds = array<i64: 1, 256>}, {pipeline_mode = #tpu.pipeline_mode<synchronous>, transform_indices = @transform_3, window_bounds = array<i64: 4, 4>}, {pipeline_mode = #tpu.pipeline_mode<synchronous>, transform_indices = @transform_4, window_bounds = array<i64: 4, 1>}, {pipeline_mode = #tpu.pipeline_mode<synchronous>, transform_indices = @transform_5, window_bounds = array<i64: 4, 9>}, {pipeline_mode = #tpu.pipeline_mode<synchronous>, transform_indices = @transform_6, window_bounds = array<i64: 4, 1>}, {pipeline_mode = #tpu.pipeline_mode<synchronous>, transform_indices = @transform_7, window_bounds = array<i64: 4, 4>}, {pipeline_mode = #tpu.pipeline_mode<synchronous>, transform_indices = @transform_8, window_bounds = array<i64: 4, 1>}, {transform_indices = @transform_9, window_bounds = array<i64: 1, 8, 256>}]} {
    %c0 = arith.constant 0 : index
    %c4 = arith.constant 4 : index
    %c0_0 = arith.constant 0 : index
    %0 = vector.load %arg1[%c0, %c4, %c0_0] : memref<1x8x256xf32, #tpu.memory_space<vmem>>, vector<1x4x256xf32>
    %1 = vector.shape_cast %0 : vector<1x4x256xf32> to vector<4x256xf32>
    %c0_1 = arith.constant 0 : index
    %c0_2 = arith.constant 0 : index
    %2 = vector.load %arg4[%c0_1, %c0_2] : memref<4x4xf32, #tpu.memory_space<vmem>>, vector<4x4xf32>
    %c0_3 = arith.constant 0 : index
    %c0_4 = arith.constant 0 : index
    %3 = vector.load %arg5[%c0_3, %c0_4] : memref<4x1xf32, #tpu.memory_space<vmem>>, vector<4x1xf32>
    %cst = arith.constant 0.000000e+00 : f32
    %4 = vector.broadcast %cst : f32 to vector<4x256xf32>
    %5 = vector.extract_strided_slice %2 {offsets = [0, 0], sizes = [4, 1], strides = [1, 1]} : vector<4x4xf32> to vector<4x1xf32>
    %6 = vector.extract_strided_slice %1 {offsets = [0, 0], sizes = [1, 256], strides = [1, 1]} : vector<4x256xf32> to vector<1x256xf32>
    %7 = vector.broadcast %5 : vector<4x1xf32> to vector<4x256xf32>
    %8 = vector.broadcast %6 : vector<1x256xf32> to vector<4x256xf32>
    %9 = arith.mulf %7, %8 : vector<4x256xf32>
    %10 = arith.addf %4, %9 : vector<4x256xf32>
    %11 = vector.extract_strided_slice %2 {offsets = [0, 1], sizes = [4, 1], strides = [1, 1]} : vector<4x4xf32> to vector<4x1xf32>
    %12 = vector.extract_strided_slice %1 {offsets = [1, 0], sizes = [1, 256], strides = [1, 1]} : vector<4x256xf32> to vector<1x256xf32>
    %13 = vector.broadcast %11 : vector<4x1xf32> to vector<4x256xf32>
    %14 = vector.broadcast %12 : vector<1x256xf32> to vector<4x256xf32>
    %15 = arith.mulf %13, %14 : vector<4x256xf32>
    %16 = arith.addf %10, %15 : vector<4x256xf32>
    %17 = vector.extract_strided_slice %2 {offsets = [0, 2], sizes = [4, 1], strides = [1, 1]} : vector<4x4xf32> to vector<4x1xf32>
    %18 = vector.extract_strided_slice %1 {offsets = [2, 0], sizes = [1, 256], strides = [1, 1]} : vector<4x256xf32> to vector<1x256xf32>
    %19 = vector.broadcast %17 : vector<4x1xf32> to vector<4x256xf32>
    %20 = vector.broadcast %18 : vector<1x256xf32> to vector<4x256xf32>
    %21 = arith.mulf %19, %20 : vector<4x256xf32>
    %22 = arith.addf %16, %21 : vector<4x256xf32>
    %23 = vector.extract_strided_slice %2 {offsets = [0, 3], sizes = [4, 1], strides = [1, 1]} : vector<4x4xf32> to vector<4x1xf32>
    %24 = vector.extract_strided_slice %1 {offsets = [3, 0], sizes = [1, 256], strides = [1, 1]} : vector<4x256xf32> to vector<1x256xf32>
    %25 = vector.broadcast %23 : vector<4x1xf32> to vector<4x256xf32>
    %26 = vector.broadcast %24 : vector<1x256xf32> to vector<4x256xf32>
    %27 = arith.mulf %25, %26 : vector<4x256xf32>
    %28 = arith.addf %22, %27 : vector<4x256xf32>
    %29 = vector.broadcast %3 : vector<4x1xf32> to vector<4x256xf32>
    %30 = arith.addf %28, %29 : vector<4x256xf32>
    %cst_5 = arith.constant 0.000000e+00 : f32
    %31 = vector.broadcast %cst_5 : f32 to vector<4x256xf32>
    %32 = arith.maximumf %30, %31 : vector<4x256xf32>
    %cst_6 = arith.constant 0.000000e+00 : f32
    %33 = vector.broadcast %cst_6 : f32 to vector<4x128xf32>
    %c0_7 = arith.constant 0 : index
    %c0_8 = arith.constant 0 : index
    %34 = vector.load %arg11[%c0_7, %c0_8] : memref<4x512xf32, #tpu.memory_space<vmem>>, vector<4x128xf32>
    tpu.vector_store %arg11[%c0_7, %c0_8], %33 {strides = array<i32>} : memref<4x512xf32, #tpu.memory_space<vmem>>, vector<4x128xf32>,
    %cst_9 = arith.constant 0.000000e+00 : f32
    %35 = vector.broadcast %cst_9 : f32 to vector<4x128xf32>
    %c0_10 = arith.constant 0 : index
    %c384 = arith.constant 384 : index
    %36 = vector.load %arg11[%c0_10, %c384] : memref<4x512xf32, #tpu.memory_space<vmem>>, vector<4x128xf32>
    tpu.vector_store %arg11[%c0_10, %c384], %35 {strides = array<i32>} : memref<4x512xf32, #tpu.memory_space<vmem>>, vector<4x128xf32>,
    %c0_11 = arith.constant 0 : index
    %c128 = arith.constant 128 : index
    %37 = vector.load %arg11[%c0_11, %c128] : memref<4x512xf32, #tpu.memory_space<vmem>>, vector<4x256xf32>
    tpu.vector_store %arg11[%c0_11, %c128], %32 {strides = array<i32>} : memref<4x512xf32, #tpu.memory_space<vmem>>, vector<4x256xf32>,
    %c0_12 = arith.constant 0 : index
    %c0_13 = arith.constant 0 : index
    %38 = vector.load %arg2[%c0_12, %c0_13] : memref<1x256xf32, #tpu.memory_space<vmem>>, vector<1x256xf32>
    %c0_14 = arith.constant 0 : index
    %c0_15 = arith.constant 0 : index
    %39 = vector.load %arg3[%c0_14, %c0_15] : memref<1x256xf32, #tpu.memory_space<vmem>>, vector<1x256xf32>
    %c0_16 = arith.constant 0 : index
    %c111 = arith.constant 111 : index
    %40 = vector.load %arg11[%c0_16, %c111] : memref<4x512xf32, #tpu.memory_space<vmem>>, vector<4x256xf32>
    %41 = vector.broadcast %38 : vector<1x256xf32> to vector<4x256xf32>
    %42 = arith.mulf %40, %41 : vector<4x256xf32>
    %c0_17 = arith.constant 0 : index
    %c112 = arith.constant 112 : index
    %43 = vector.load %arg11[%c0_17, %c112] : memref<4x512xf32, #tpu.memory_space<vmem>>, vector<4x256xf32>
    %c0_18 = arith.constant 0 : index
    %c113 = arith.constant 113 : index
    %44 = vector.load %arg11[%c0_18, %c113] : memref<4x512xf32, #tpu.memory_space<vmem>>, vector<4x256xf32>
    %45 = vector.broadcast %39 : vector<1x256xf32> to vector<4x256xf32>
    %46 = arith.mulf %44, %45 : vector<4x256xf32>
    %c0_19 = arith.constant 0 : index
    %c127 = arith.constant 127 : index
    %47 = vector.load %arg11[%c0_19, %c127] : memref<4x512xf32, #tpu.memory_space<vmem>>, vector<4x256xf32>
    %48 = vector.broadcast %38 : vector<1x256xf32> to vector<4x256xf32>
    %49 = arith.mulf %47, %48 : vector<4x256xf32>
    %c0_20 = arith.constant 0 : index
    %c128_21 = arith.constant 128 : index
    %50 = vector.load %arg11[%c0_20, %c128_21] : memref<4x512xf32, #tpu.memory_space<vmem>>, vector<4x256xf32>
    %c0_22 = arith.constant 0 : index
    %c129 = arith.constant 129 : index
    %51 = vector.load %arg11[%c0_22, %c129] : memref<4x512xf32, #tpu.memory_space<vmem>>, vector<4x256xf32>
    %52 = vector.broadcast %39 : vector<1x256xf32> to vector<4x256xf32>
    %53 = arith.mulf %51, %52 : vector<4x256xf32>
    %c0_23 = arith.constant 0 : index
    %c143 = arith.constant 143 : index
    %54 = vector.load %arg11[%c0_23, %c143] : memref<4x512xf32, #tpu.memory_space<vmem>>, vector<4x256xf32>
    %55 = vector.broadcast %38 : vector<1x256xf32> to vector<4x256xf32>
    %56 = arith.mulf %54, %55 : vector<4x256xf32>
    %c0_24 = arith.constant 0 : index
    %c144 = arith.constant 144 : index
    %57 = vector.load %arg11[%c0_24, %c144] : memref<4x512xf32, #tpu.memory_space<vmem>>, vector<4x256xf32>
    %c0_25 = arith.constant 0 : index
    %c145 = arith.constant 145 : index
    %58 = vector.load %arg11[%c0_25, %c145] : memref<4x512xf32, #tpu.memory_space<vmem>>, vector<4x256xf32>
    %59 = vector.broadcast %39 : vector<1x256xf32> to vector<4x256xf32>
    %60 = arith.mulf %58, %59 : vector<4x256xf32>
    %c0_26 = arith.constant 0 : index
    %c0_27 = arith.constant 0 : index
    %61 = vector.load %arg6[%c0_26, %c0_27] : memref<4x9xf32, #tpu.memory_space<vmem>>, vector<4x9xf32>
    %cst_28 = arith.constant 0.000000e+00 : f32
    %62 = vector.broadcast %cst_28 : f32 to vector<4x256xf32>
    %63 = vector.extract_strided_slice %61 {offsets = [0, 0], sizes = [4, 1], strides = [1, 1]} : vector<4x9xf32> to vector<4x1xf32>
    %64 = vector.broadcast %63 : vector<4x1xf32> to vector<4x256xf32>
    %65 = arith.mulf %64, %42 : vector<4x256xf32>
    %66 = arith.addf %62, %65 : vector<4x256xf32>
    %67 = vector.extract_strided_slice %61 {offsets = [0, 1], sizes = [4, 1], strides = [1, 1]} : vector<4x9xf32> to vector<4x1xf32>
    %68 = vector.broadcast %67 : vector<4x1xf32> to vector<4x256xf32>
    %69 = arith.mulf %68, %43 : vector<4x256xf32>
    %70 = arith.addf %66, %69 : vector<4x256xf32>
    %71 = vector.extract_strided_slice %61 {offsets = [0, 2], sizes = [4, 1], strides = [1, 1]} : vector<4x9xf32> to vector<4x1xf32>
    %72 = vector.broadcast %71 : vector<4x1xf32> to vector<4x256xf32>
    %73 = arith.mulf %72, %46 : vector<4x256xf32>
    %74 = arith.addf %70, %73 : vector<4x256xf32>
    %75 = vector.extract_strided_slice %61 {offsets = [0, 3], sizes = [4, 1], strides = [1, 1]} : vector<4x9xf32> to vector<4x1xf32>
    %76 = vector.broadcast %75 : vector<4x1xf32> to vector<4x256xf32>
    %77 = arith.mulf %76, %49 : vector<4x256xf32>
    %78 = arith.addf %74, %77 : vector<4x256xf32>
    %79 = vector.extract_strided_slice %61 {offsets = [0, 4], sizes = [4, 1], strides = [1, 1]} : vector<4x9xf32> to vector<4x1xf32>
    %80 = vector.broadcast %79 : vector<4x1xf32> to vector<4x256xf32>
    %81 = arith.mulf %80, %50 : vector<4x256xf32>
    %82 = arith.addf %78, %81 : vector<4x256xf32>
    %83 = vector.extract_strided_slice %61 {offsets = [0, 5], sizes = [4, 1], strides = [1, 1]} : vector<4x9xf32> to vector<4x1xf32>
    %84 = vector.broadcast %83 : vector<4x1xf32> to vector<4x256xf32>
    %85 = arith.mulf %84, %53 : vector<4x256xf32>
    %86 = arith.addf %82, %85 : vector<4x256xf32>
    %87 = vector.extract_strided_slice %61 {offsets = [0, 6], sizes = [4, 1], strides = [1, 1]} : vector<4x9xf32> to vector<4x1xf32>
    %88 = vector.broadcast %87 : vector<4x1xf32> to vector<4x256xf32>
    %89 = arith.mulf %88, %56 : vector<4x256xf32>
    %90 = arith.addf %86, %89 : vector<4x256xf32>
    %91 = vector.extract_strided_slice %61 {offsets = [0, 7], sizes = [4, 1], strides = [1, 1]} : vector<4x9xf32> to vector<4x1xf32>
    %92 = vector.broadcast %91 : vector<4x1xf32> to vector<4x256xf32>
    %93 = arith.mulf %92, %57 : vector<4x256xf32>
    %94 = arith.addf %90, %93 : vector<4x256xf32>
    %95 = vector.extract_strided_slice %61 {offsets = [0, 8], sizes = [4, 1], strides = [1, 1]} : vector<4x9xf32> to vector<4x1xf32>
    %96 = vector.broadcast %95 : vector<4x1xf32> to vector<4x256xf32>
    %97 = arith.mulf %96, %60 : vector<4x256xf32>
    %98 = arith.addf %94, %97 : vector<4x256xf32>
    %c0_29 = arith.constant 0 : index
    %c0_30 = arith.constant 0 : index
    %99 = vector.load %arg7[%c0_29, %c0_30] : memref<4x1xf32, #tpu.memory_space<vmem>>, vector<4x1xf32>
    %100 = vector.broadcast %99 : vector<4x1xf32> to vector<4x256xf32>
    %101 = arith.addf %98, %100 : vector<4x256xf32>
    %c0_31 = arith.constant 0 : index
    %c0_32 = arith.constant 0 : index
    %102 = vector.load %arg8[%c0_31, %c0_32] : memref<4x4xf32, #tpu.memory_space<vmem>>, vector<4x4xf32>
    %c0_33 = arith.constant 0 : index
    %c0_34 = arith.constant 0 : index
    %103 = vector.load %arg9[%c0_33, %c0_34] : memref<4x1xf32, #tpu.memory_space<vmem>>, vector<4x1xf32>
    %cst_35 = arith.constant 0.000000e+00 : f32
    %104 = vector.broadcast %cst_35 : f32 to vector<4x256xf32>
    %105 = vector.extract_strided_slice %102 {offsets = [0, 0], sizes = [4, 1], strides = [1, 1]} : vector<4x4xf32> to vector<4x1xf32>
    %106 = vector.extract_strided_slice %101 {offsets = [0, 0], sizes = [1, 256], strides = [1, 1]} : vector<4x256xf32> to vector<1x256xf32>
    %107 = vector.broadcast %105 : vector<4x1xf32> to vector<4x256xf32>
    %108 = vector.broadcast %106 : vector<1x256xf32> to vector<4x256xf32>
    %109 = arith.mulf %107, %108 : vector<4x256xf32>
    %110 = arith.addf %104, %109 : vector<4x256xf32>
    %111 = vector.extract_strided_slice %102 {offsets = [0, 1], sizes = [4, 1], strides = [1, 1]} : vector<4x4xf32> to vector<4x1xf32>
    %112 = vector.extract_strided_slice %101 {offsets = [1, 0], sizes = [1, 256], strides = [1, 1]} : vector<4x256xf32> to vector<1x256xf32>
    %113 = vector.broadcast %111 : vector<4x1xf32> to vector<4x256xf32>
    %114 = vector.broadcast %112 : vector<1x256xf32> to vector<4x256xf32>
    %115 = arith.mulf %113, %114 : vector<4x256xf32>
    %116 = arith.addf %110, %115 : vector<4x256xf32>
    %117 = vector.extract_strided_slice %102 {offsets = [0, 2], sizes = [4, 1], strides = [1, 1]} : vector<4x4xf32> to vector<4x1xf32>
    %118 = vector.extract_strided_slice %101 {offsets = [2, 0], sizes = [1, 256], strides = [1, 1]} : vector<4x256xf32> to vector<1x256xf32>
    %119 = vector.broadcast %117 : vector<4x1xf32> to vector<4x256xf32>
    %120 = vector.broadcast %118 : vector<1x256xf32> to vector<4x256xf32>
    %121 = arith.mulf %119, %120 : vector<4x256xf32>
    %122 = arith.addf %116, %121 : vector<4x256xf32>
    %123 = vector.extract_strided_slice %102 {offsets = [0, 3], sizes = [4, 1], strides = [1, 1]} : vector<4x4xf32> to vector<4x1xf32>
    %124 = vector.extract_strided_slice %101 {offsets = [3, 0], sizes = [1, 256], strides = [1, 1]} : vector<4x256xf32> to vector<1x256xf32>
    %125 = vector.broadcast %123 : vector<4x1xf32> to vector<4x256xf32>
    %126 = vector.broadcast %124 : vector<1x256xf32> to vector<4x256xf32>
    %127 = arith.mulf %125, %126 : vector<4x256xf32>
    %128 = arith.addf %122, %127 : vector<4x256xf32>
    %129 = vector.broadcast %103 : vector<4x1xf32> to vector<4x256xf32>
    %130 = arith.addf %128, %129 : vector<4x256xf32>
    %cst_36 = arith.constant 0.000000e+00 : f32
    %131 = vector.broadcast %cst_36 : f32 to vector<4x256xf32>
    %132 = arith.maximumf %130, %131 : vector<4x256xf32>
    %c0_37 = arith.constant 0 : index
    %c0_38 = arith.constant 0 : index
    %c0_39 = arith.constant 0 : index
    %133 = vector.load %arg1[%c0_37, %c0_38, %c0_39] : memref<1x8x256xf32, #tpu.memory_space<vmem>>, vector<1x1x256xf32>
    %134 = vector.shape_cast %133 : vector<1x1x256xf32> to vector<1x256xf32>
    %c0_40 = arith.constant 0 : index
    %c0_41 = arith.constant 0 : index
    %c0_42 = arith.constant 0 : index
    %135 = vector.load %arg10[%c0_40, %c0_41, %c0_42] : memref<1x8x256xf32, #tpu.memory_space<vmem>>, vector<1x1x256xf32>
    %136 = vector.shape_cast %135 : vector<1x1x256xf32> to vector<1x256xf32>
    %137 = vector.shape_cast %134 : vector<1x256xf32> to vector<1x1x256xf32>
    tpu.vector_store %arg10[%c0_40, %c0_41, %c0_42], %137 {strides = array<i32>} : memref<1x8x256xf32, #tpu.memory_space<vmem>>, vector<1x1x256xf32>,
    %138 = vector.extract_strided_slice %132 {offsets = [0, 0], sizes = [1, 256], strides = [1, 1]} : vector<4x256xf32> to vector<1x256xf32>
    %c0_43 = arith.constant 0 : index
    %c1 = arith.constant 1 : index
    %c0_44 = arith.constant 0 : index
    %139 = vector.load %arg10[%c0_43, %c1, %c0_44] : memref<1x8x256xf32, #tpu.memory_space<vmem>>, vector<1x1x256xf32>
    %140 = vector.shape_cast %139 : vector<1x1x256xf32> to vector<1x256xf32>
    %141 = vector.shape_cast %138 : vector<1x256xf32> to vector<1x1x256xf32>
    tpu.vector_store %arg10[%c0_43, %c1, %c0_44], %141 {strides = array<i32>} : memref<1x8x256xf32, #tpu.memory_space<vmem>>, vector<1x1x256xf32>,
    %c0_45 = arith.constant 0 : index
    %c1_46 = arith.constant 1 : index
    %c0_47 = arith.constant 0 : index
    %142 = vector.load %arg1[%c0_45, %c1_46, %c0_47] : memref<1x8x256xf32, #tpu.memory_space<vmem>>, vector<1x1x256xf32>
    %143 = vector.shape_cast %142 : vector<1x1x256xf32> to vector<1x256xf32>
    %c0_48 = arith.constant 0 : index
    %c2 = arith.constant 2 : index
    %c0_49 = arith.constant 0 : index
    %144 = vector.load %arg10[%c0_48, %c2, %c0_49] : memref<1x8x256xf32, #tpu.memory_space<vmem>>, vector<1x1x256xf32>
    %145 = vector.shape_cast %144 : vector<1x1x256xf32> to vector<1x256xf32>
    %146 = vector.shape_cast %143 : vector<1x256xf32> to vector<1x1x256xf32>
    tpu.vector_store %arg10[%c0_48, %c2, %c0_49], %146 {strides = array<i32>} : memref<1x8x256xf32, #tpu.memory_space<vmem>>, vector<1x1x256xf32>,
    %147 = vector.extract_strided_slice %132 {offsets = [1, 0], sizes = [1, 256], strides = [1, 1]} : vector<4x256xf32> to vector<1x256xf32>
    %c0_50 = arith.constant 0 : index
    %c3 = arith.constant 3 : index
    %c0_51 = arith.constant 0 : index
    %148 = vector.load %arg10[%c0_50, %c3, %c0_51] : memref<1x8x256xf32, #tpu.memory_space<vmem>>, vector<1x1x256xf32>
    %149 = vector.shape_cast %148 : vector<1x1x256xf32> to vector<1x256xf32>
    %150 = vector.shape_cast %147 : vector<1x256xf32> to vector<1x1x256xf32>
    tpu.vector_store %arg10[%c0_50, %c3, %c0_51], %150 {strides = array<i32>} : memref<1x8x256xf32, #tpu.memory_space<vmem>>, vector<1x1x256xf32>,
    %c0_52 = arith.constant 0 : index
    %c2_53 = arith.constant 2 : index
    %c0_54 = arith.constant 0 : index
    %151 = vector.load %arg1[%c0_52, %c2_53, %c0_54] : memref<1x8x256xf32, #tpu.memory_space<vmem>>, vector<1x1x256xf32>
    %152 = vector.shape_cast %151 : vector<1x1x256xf32> to vector<1x256xf32>
    %c0_55 = arith.constant 0 : index
    %c4_56 = arith.constant 4 : index
    %c0_57 = arith.constant 0 : index
    %153 = vector.load %arg10[%c0_55, %c4_56, %c0_57] : memref<1x8x256xf32, #tpu.memory_space<vmem>>, vector<1x1x256xf32>
    %154 = vector.shape_cast %153 : vector<1x1x256xf32> to vector<1x256xf32>
    %155 = vector.shape_cast %152 : vector<1x256xf32> to vector<1x1x256xf32>
    tpu.vector_store %arg10[%c0_55, %c4_56, %c0_57], %155 {strides = array<i32>} : memref<1x8x256xf32, #tpu.memory_space<vmem>>, vector<1x1x256xf32>,
    %156 = vector.extract_strided_slice %132 {offsets = [2, 0], sizes = [1, 256], strides = [1, 1]} : vector<4x256xf32> to vector<1x256xf32>
    %c0_58 = arith.constant 0 : index
    %c5 = arith.constant 5 : index
    %c0_59 = arith.constant 0 : index
    %157 = vector.load %arg10[%c0_58, %c5, %c0_59] : memref<1x8x256xf32, #tpu.memory_space<vmem>>, vector<1x1x256xf32>
    %158 = vector.shape_cast %157 : vector<1x1x256xf32> to vector<1x256xf32>
    %159 = vector.shape_cast %156 : vector<1x256xf32> to vector<1x1x256xf32>
    tpu.vector_store %arg10[%c0_58, %c5, %c0_59], %159 {strides = array<i32>} : memref<1x8x256xf32, #tpu.memory_space<vmem>>, vector<1x1x256xf32>,
    %c0_60 = arith.constant 0 : index
    %c3_61 = arith.constant 3 : index
    %c0_62 = arith.constant 0 : index
    %160 = vector.load %arg1[%c0_60, %c3_61, %c0_62] : memref<1x8x256xf32, #tpu.memory_space<vmem>>, vector<1x1x256xf32>
    %161 = vector.shape_cast %160 : vector<1x1x256xf32> to vector<1x256xf32>
    %c0_63 = arith.constant 0 : index
    %c6 = arith.constant 6 : index
    %c0_64 = arith.constant 0 : index
    %162 = vector.load %arg10[%c0_63, %c6, %c0_64] : memref<1x8x256xf32, #tpu.memory_space<vmem>>, vector<1x1x256xf32>
    %163 = vector.shape_cast %162 : vector<1x1x256xf32> to vector<1x256xf32>
    %164 = vector.shape_cast %161 : vector<1x256xf32> to vector<1x1x256xf32>
    tpu.vector_store %arg10[%c0_63, %c6, %c0_64], %164 {strides = array<i32>} : memref<1x8x256xf32, #tpu.memory_space<vmem>>, vector<1x1x256xf32>,
    %165 = vector.extract_strided_slice %132 {offsets = [3, 0], sizes = [1, 256], strides = [1, 1]} : vector<4x256xf32> to vector<1x256xf32>
    %c0_65 = arith.constant 0 : index
    %c7 = arith.constant 7 : index
    %c0_66 = arith.constant 0 : index
    %166 = vector.load %arg10[%c0_65, %c7, %c0_66] : memref<1x8x256xf32, #tpu.memory_space<vmem>>, vector<1x1x256xf32>
    %167 = vector.shape_cast %166 : vector<1x1x256xf32> to vector<1x256xf32>
    %168 = vector.shape_cast %165 : vector<1x256xf32> to vector<1x1x256xf32>
    tpu.vector_store %arg10[%c0_65, %c7, %c0_66], %168 {strides = array<i32>} : memref<1x8x256xf32, #tpu.memory_space<vmem>>, vector<1x1x256xf32>,
    return
  }
  func.func @transform_0(%arg0: i32) -> (i32, i32, i32) {
    %c0_i32 = arith.constant 0 : i32
    %c0_i32_0 = arith.constant 0 : i32
    %c0_i32_1 = arith.constant 0 : i32
    return %arg0, %c0_i32, %c0_i32_0 : i32, i32, i32
  }
  func.func @transform_1(%arg0: i32) -> (i32, i32) {
    %c0_i32 = arith.constant 0 : i32
    %c0_i32_0 = arith.constant 0 : i32
    %c0_i32_1 = arith.constant 0 : i32
    return %c0_i32, %c0_i32_0 : i32, i32
  }
  func.func @transform_2(%arg0: i32) -> (i32, i32) {
    %c0_i32 = arith.constant 0 : i32
    %c0_i32_0 = arith.constant 0 : i32
    %c0_i32_1 = arith.constant 0 : i32
    return %c0_i32, %c0_i32_0 : i32, i32
  }
  func.func @transform_3(%arg0: i32) -> (i32, i32) {
    %c0_i32 = arith.constant 0 : i32
    %c0_i32_0 = arith.constant 0 : i32
    %c0_i32_1 = arith.constant 0 : i32
    return %c0_i32, %c0_i32_0 : i32, i32
  }
  func.func @transform_4(%arg0: i32) -> (i32, i32) {
    %c0_i32 = arith.constant 0 : i32
    %c0_i32_0 = arith.constant 0 : i32
    %c0_i32_1 = arith.constant 0 : i32
    return %c0_i32, %c0_i32_0 : i32, i32
  }
  func.func @transform_5(%arg0: i32) -> (i32, i32) {
    %c0_i32 = arith.constant 0 : i32
    %c0_i32_0 = arith.constant 0 : i32
    %c0_i32_1 = arith.constant 0 : i32
    return %c0_i32, %c0_i32_0 : i32, i32
  }
  func.func @transform_6(%arg0: i32) -> (i32, i32) {
    %c0_i32 = arith.constant 0 : i32
    %c0_i32_0 = arith.constant 0 : i32
    %c0_i32_1 = arith.constant 0 : i32
    return %c0_i32, %c0_i32_0 : i32, i32
  }
  func.func @transform_7(%arg0: i32) -> (i32, i32) {
    %c0_i32 = arith.constant 0 : i32
    %c0_i32_0 = arith.constant 0 : i32
    %c0_i32_1 = arith.constant 0 : i32
    return %c0_i32, %c0_i32_0 : i32, i32
  }
  func.func @transform_8(%arg0: i32) -> (i32, i32) {
    %c0_i32 = arith.constant 0 : i32
    %c0_i32_0 = arith.constant 0 : i32
    %c0_i32_1 = arith.constant 0 : i32
    return %c0_i32, %c0_i32_0 : i32, i32
  }
  func.func @transform_9(%arg0: i32) -> (i32, i32, i32) {
    %c0_i32 = arith.constant 0 : i32
    %c0_i32_0 = arith.constant 0 : i32
    %c0_i32_1 = arith.constant 0 : i32
    return %arg0, %c0_i32, %c0_i32_0 : i32, i32, i32
  }
}

</mosaic_0001>

<llo_original>
// kernel: decoder_residual_stride1.1
$region0: #{decoder_residual_stride1.1}
  #allocation0 [shape = 'u32[]', space=smem, size = 0x4, offset = 0x4, fixed_abs, tag = 'smem constant byte address 0x4 - core index']
  #allocation1 [shape = 'u32[144,128]{1,0:T(1,128)}', space=vmem, size = 0x12000, scoped, tag = 'internal scratch']
  #allocation2 [shape = 'f32[4,512]{1,0:T(4,128)}', space=vmem, size = 0x2000, scoped, tag = 'scratch operand']
  %s0 = inlined_call_operand.vmem [shape: f32[2,8,256], index: 0, kind: input, shape index: {}]
  %s1 = inlined_call_operand.vmem [shape: f32[1,256], index: 1, kind: input, shape index: {}]
  %s2 = inlined_call_operand.vmem [shape: f32[1,256], index: 2, kind: input, shape index: {}]
  %s3 = inlined_call_operand.vmem [shape: f32[4,4], index: 3, kind: input, shape index: {}]
  %s4 = inlined_call_operand.vmem [shape: f32[4,1], index: 4, kind: input, shape index: {}]
  %s5 = inlined_call_operand.vmem [shape: f32[4,9], index: 5, kind: input, shape index: {}]
  %s6 = inlined_call_operand.vmem [shape: f32[4,1], index: 6, kind: input, shape index: {}]
  %s7 = inlined_call_operand.vmem [shape: f32[4,4], index: 7, kind: input, shape index: {}]
  %s8 = inlined_call_operand.vmem [shape: f32[4,1], index: 8, kind: input, shape index: {}]
  %s9 = inlined_call_operand.vmem [shape: f32[2,8,256], index: 9, kind: output, shape index: {}]
  %s10 = sld [smem:[#allocation0]]
  $region69: #{decoder_residual_stride1.1} parent=0
    _
  %s12 = ssub.s32 1, %s10
  %s13 = scalar_select 0, %s12, %s10
  loop: start=0, step=1, limit=4
  $region2: #{decoder_residual_stride1.1} parent=0 // loop_pre_header
    _
  $region3: #{decoder_residual_stride1.1} parent=0 // loop_header
    %s15 = sphi 0, %s19
    %p16 = scmp.ge.s32.totalorder %s15, 4
    %s25 = sphi 0, %s27
    %s28 = sphi 0, %s25
    %s29 = sphi 0, %s28
    %s45 = sphi 0, %s29
    %s49 = sphi 0, %s49
    %s51 = sphi 0, %s49
    %s52 = sphi 0, %s51
    %s66 = sphi 0, %s52
    %s70 = sphi 0, %s70
    %s72 = sphi 0, %s70
    %s73 = sphi 0, %s72
    %s87 = sphi 0, %s73
    %s91 = sphi 0, %s91
    %s93 = sphi 0, %s91
    %s94 = sphi 0, %s93
    %s108 = sphi 0, %s94
    %s112 = sphi 0, %s112
    %s114 = sphi 0, %s112
    %s115 = sphi 0, %s114
    %s129 = sphi 0, %s115
    %s133 = sphi 0, %s133
    %s135 = sphi 0, %s133
    %s136 = sphi 0, %s135
    %s150 = sphi 0, %s136
    %s154 = sphi 0, %s154
    %s156 = sphi 0, %s154
    %s157 = sphi 0, %s156
    %s171 = sphi 0, %s157
    %s175 = sphi 0, %s175
    %s177 = sphi 0, %s175
    %s178 = sphi 0, %s177
    %s192 = sphi 0, %s178
    %s196 = sphi 0, %s196
    %s198 = sphi 0, %s196
    %s199 = sphi 0, %s198
    %s213 = sphi 0, %s199
    %s219 = sphi 0, %s221
    %s222 = sphi 0, %s219
    %s223 = sphi 0, %s222
    %s239 = sphi 0, %s223
  $region4: #{decoder_residual_stride1.1} parent=0 // loop_header_branch
    %18 = sbr.rel (%p16) target = $region8
  $region5: #{decoder_residual_stride1.1} parent=0 // loop_body
    %s20 = ssub.s32 %s15, 1
    %s21 = ssub.s32 %s15, 2
    %s22 = sadd.s32 %s15, 1
    %s23 = ssub.s32 %s15, %s22
    %p24 = scmp.eq.s32.totalorder %s23, 0
    %s26 = sadd.s32 %s25, 1
    %s27 = scalar_select %p24, %s25, %s26
    %p30 = pneg %p24
    %p31 = scmp.eq.s32.totalorder %s15, 1
    %p32 = por %p30, %p31
    %p33 = scmp.ne.s32.totalorder %s25, %s28
    %p34 = scmp.eq.s32.totalorder %s15, 0
    %p35 = por %p33, %p34
    %p36 = scmp.ne.s32.totalorder %s25, %s28
    %p37 = scmp.eq.s32.totalorder %s20, 1
    %p38 = por %p36, %p37
    %p39 = scmp.ne.s32.totalorder %s28, %s29
    %p40 = scmp.eq.s32.totalorder %s20, 0
    %p41 = por %p39, %p40
    %p42 = scmp.ne.s32.totalorder %s28, %s29
    %p43 = scmp.eq.s32.totalorder %s21, 1
    %p44 = por %p42, %p43
    %p46 = scmp.ne.s32.totalorder %s29, %s45
    %p47 = scmp.eq.s32.totalorder %s21, 0
    %p48 = por %p46, %p47
    %s50 = sadd.s32 %s49, 1
    %p53 = scmp.eq.s32.totalorder %s15, 1
    %p54 = scmp.ne.s32.totalorder %s49, %s51
    %p55 = scmp.eq.s32.totalorder %s15, 0
    %p56 = por %p54, %p55
    %p57 = scmp.ne.s32.totalorder %s49, %s51
    %p58 = scmp.eq.s32.totalorder %s20, 1
    %p59 = por %p57, %p58
    %p60 = scmp.ne.s32.totalorder %s51, %s52
    %p61 = scmp.eq.s32.totalorder %s20, 0
    %p62 = por %p60, %p61
    %p63 = scmp.ne.s32.totalorder %s51, %s52
    %p64 = scmp.eq.s32.totalorder %s21, 1
    %p65 = por %p63, %p64
    %p67 = scmp.ne.s32.totalorder %s52, %s66
    %p68 = scmp.eq.s32.totalorder %s21, 0
    %p69 = por %p67, %p68
    %s71 = sadd.s32 %s70, 1
    %p74 = scmp.eq.s32.totalorder %s15, 1
    %p75 = scmp.ne.s32.totalorder %s70, %s72
    %p76 = scmp.eq.s32.totalorder %s15, 0
    %p77 = por %p75, %p76
    %p78 = scmp.ne.s32.totalorder %s70, %s72
    %p79 = scmp.eq.s32.totalorder %s20, 1
    %p80 = por %p78, %p79
    %p81 = scmp.ne.s32.totalorder %s72, %s73
    %p82 = scmp.eq.s32.totalorder %s20, 0
    %p83 = por %p81, %p82
    %p84 = scmp.ne.s32.totalorder %s72, %s73
    %p85 = scmp.eq.s32.totalorder %s21, 1
    %p86 = por %p84, %p85
    %p88 = scmp.ne.s32.totalorder %s73, %s87
    %p89 = scmp.eq.s32.totalorder %s21, 0
    %p90 = por %p88, %p89
    %s92 = sadd.s32 %s91, 1
    %p95 = scmp.eq.s32.totalorder %s15, 1
    %p96 = scmp.ne.s32.totalorder %s91, %s93
    %p97 = scmp.eq.s32.totalorder %s15, 0
    %p98 = por %p96, %p97
    %p99 = scmp.ne.s32.totalorder %s91, %s93
    %p100 = scmp.eq.s32.totalorder %s20, 1
    %p101 = por %p99, %p100
    %p102 = scmp.ne.s32.totalorder %s93, %s94
    %p103 = scmp.eq.s32.totalorder %s20, 0
    %p104 = por %p102, %p103
    %p105 = scmp.ne.s32.totalorder %s93, %s94
    %p106 = scmp.eq.s32.totalorder %s21, 1
    %p107 = por %p105, %p106
    %p109 = scmp.ne.s32.totalorder %s94, %s108
    %p110 = scmp.eq.s32.totalorder %s21, 0
    %p111 = por %p109, %p110
    %s113 = sadd.s32 %s112, 1
    %p116 = scmp.eq.s32.totalorder %s15, 1
    %p117 = scmp.ne.s32.totalorder %s112, %s114
    %p118 = scmp.eq.s32.totalorder %s15, 0
    %p119 = por %p117, %p118
    %p120 = scmp.ne.s32.totalorder %s112, %s114
    %p121 = scmp.eq.s32.totalorder %s20, 1
    %p122 = por %p120, %p121
    %p123 = scmp.ne.s32.totalorder %s114, %s115
    %p124 = scmp.eq.s32.totalorder %s20, 0
    %p125 = por %p123, %p124
    %p126 = scmp.ne.s32.totalorder %s114, %s115
    %p127 = scmp.eq.s32.totalorder %s21, 1
    %p128 = por %p126, %p127
    %p130 = scmp.ne.s32.totalorder %s115, %s129
    %p131 = scmp.eq.s32.totalorder %s21, 0
    %p132 = por %p130, %p131
    %s134 = sadd.s32 %s133, 1
    %p137 = scmp.eq.s32.totalorder %s15, 1
    %p138 = scmp.ne.s32.totalorder %s133, %s135
    %p139 = scmp.eq.s32.totalorder %s15, 0
    %p140 = por %p138, %p139
    %p141 = scmp.ne.s32.totalorder %s133, %s135
    %p142 = scmp.eq.s32.totalorder %s20, 1
    %p143 = por %p141, %p142
    %p144 = scmp.ne.s32.totalorder %s135, %s136
    %p145 = scmp.eq.s32.totalorder %s20, 0
    %p146 = por %p144, %p145
    %p147 = scmp.ne.s32.totalorder %s135, %s136
    %p148 = scmp.eq.s32.totalorder %s21, 1
    %p149 = por %p147, %p148
    %p151 = scmp.ne.s32.totalorder %s136, %s150
    %p152 = scmp.eq.s32.totalorder %s21, 0
    %p153 = por %p151, %p152
    %s155 = sadd.s32 %s154, 1
    %p158 = scmp.eq.s32.totalorder %s15, 1
    %p159 = scmp.ne.s32.totalorder %s154, %s156
    %p160 = scmp.eq.s32.totalorder %s15, 0
    %p161 = por %p159, %p160
    %p162 = scmp.ne.s32.totalorder %s154, %s156
    %p163 = scmp.eq.s32.totalorder %s20, 1
    %p164 = por %p162, %p163
    %p165 = scmp.ne.s32.totalorder %s156, %s157
    %p166 = scmp.eq.s32.totalorder %s20, 0
    %p167 = por %p165, %p166
    %p168 = scmp.ne.s32.totalorder %s156, %s157
    %p169 = scmp.eq.s32.totalorder %s21, 1
    %p170 = por %p168, %p169
    %p172 = scmp.ne.s32.totalorder %s157, %s171
    %p173 = scmp.eq.s32.totalorder %s21, 0
    %p174 = por %p172, %p173
    %s176 = sadd.s32 %s175, 1
    %p179 = scmp.eq.s32.totalorder %s15, 1
    %p180 = scmp.ne.s32.totalorder %s175, %s177
    %p181 = scmp.eq.s32.totalorder %s15, 0
    %p182 = por %p180, %p181
    %p183 = scmp.ne.s32.totalorder %s175, %s177
    %p184 = scmp.eq.s32.totalorder %s20, 1
    %p185 = por %p183, %p184
    %p186 = scmp.ne.s32.totalorder %s177, %s178
    %p187 = scmp.eq.s32.totalorder %s20, 0
    %p188 = por %p186, %p187
    %p189 = scmp.ne.s32.totalorder %s177, %s178
    %p190 = scmp.eq.s32.totalorder %s21, 1
    %p191 = por %p189, %p190
    %p193 = scmp.ne.s32.totalorder %s178, %s192
    %p194 = scmp.eq.s32.totalorder %s21, 0
    %p195 = por %p193, %p194
    %s197 = sadd.s32 %s196, 1
    %p200 = scmp.eq.s32.totalorder %s15, 1
    %p201 = scmp.ne.s32.totalorder %s196, %s198
    %p202 = scmp.eq.s32.totalorder %s15, 0
    %p203 = por %p201, %p202
    %p204 = scmp.ne.s32.totalorder %s196, %s198
    %p205 = scmp.eq.s32.totalorder %s20, 1
    %p206 = por %p204, %p205
    %p207 = scmp.ne.s32.totalorder %s198, %s199
    %p208 = scmp.eq.s32.totalorder %s20, 0
    %p209 = por %p207, %p208
    %p210 = scmp.ne.s32.totalorder %s198, %s199
    %p211 = scmp.eq.s32.totalorder %s21, 1
    %p212 = por %p210, %p211
    %p214 = scmp.ne.s32.totalorder %s199, %s213
    %p215 = scmp.eq.s32.totalorder %s21, 0
    %p216 = por %p214, %p215
    %s217 = ssub.s32 %s15, %s22
    %p218 = scmp.eq.s32.totalorder %s217, 0
    %s220 = sadd.s32 %s219, 1
    %s221 = scalar_select %p218, %s219, %s220
    %p224 = pneg %p218
    %p225 = scmp.eq.s32.totalorder %s15, 1
    %p226 = por %p224, %p225
    %p227 = scmp.ne.s32.totalorder %s219, %s222
    %p228 = scmp.eq.s32.totalorder %s15, 0
    %p229 = por %p227, %p228
    %p230 = scmp.ne.s32.totalorder %s219, %s222
    %p231 = scmp.eq.s32.totalorder %s20, 1
    %p232 = por %p230, %p231
    %p233 = scmp.ne.s32.totalorder %s222, %s223
    %p234 = scmp.eq.s32.totalorder %s20, 0
    %p235 = por %p233, %p234
    %p236 = scmp.ne.s32.totalorder %s222, %s223
    %p237 = scmp.eq.s32.totalorder %s21, 1
    %p238 = por %p236, %p237
    %p240 = scmp.ne.s32.totalorder %s223, %s239
    %p241 = scmp.eq.s32.totalorder %s21, 0
    %p242 = por %p240, %p241
    %p243 = scmp.le.s32.totalorder 1, %s15
    %p244 = scmp.lt.s32.totalorder %s15, 3
    %p245 = pnand %p243, %p244
    %p246 = pneg %p245
    // Predicated region
    $region9: #{decoder_residual_stride1.1} parent=5 // pred_check
      _
    $region10: #{decoder_residual_stride1.1} parent=5 // pred_check_branch
      %248 = sbr.rel (%p245) target = $region12
    $region11: #{decoder_residual_stride1.1} parent=5 // pred_region
      %s249 = ssub.s32 %s15, 1
      // Predicated region
      $region13: #{decoder_residual_stride1.1} parent=11 // pred_check
        %p250 = pneg %p62
      $region14: #{decoder_residual_stride1.1} parent=11 // pred_check_branch
        %252 = sbr.rel (%p250) target = $region16
      $region15: #{decoder_residual_stride1.1} parent=11 // pred_region
        _
      $region16: #{decoder_residual_stride1.1} parent=11 // pred_fallthru
        _
      // Predicated region
      $region17: #{decoder_residual_stride1.1} parent=11 // pred_check
        %p253 = pneg %p83
      $region18: #{decoder_residual_stride1.1} parent=11 // pred_check_branch
        %255 = sbr.rel (%p253) target = $region20
      $region19: #{decoder_residual_stride1.1} parent=11 // pred_region
        _
      $region20: #{decoder_residual_stride1.1} parent=11 // pred_fallthru
        _
      // Predicated region
      $region21: #{decoder_residual_stride1.1} parent=11 // pred_check
        %p256 = pneg %p104
      $region22: #{decoder_residual_stride1.1} parent=11 // pred_check_branch
        %258 = sbr.rel (%p256) target = $region24
      $region23: #{decoder_residual_stride1.1} parent=11 // pred_region
        _
      $region24: #{decoder_residual_stride1.1} parent=11 // pred_fallthru
        _
      // Predicated region
      $region25: #{decoder_residual_stride1.1} parent=11 // pred_check
        %p259 = pneg %p125
      $region26: #{decoder_residual_stride1.1} parent=11 // pred_check_branch
        %261 = sbr.rel (%p259) target = $region28
      $region27: #{decoder_residual_stride1.1} parent=11 // pred_region
        _
      $region28: #{decoder_residual_stride1.1} parent=11 // pred_fallthru
        _
      // Predicated region
      $region29: #{decoder_residual_stride1.1} parent=11 // pred_check
        %p262 = pneg %p146
      $region30: #{decoder_residual_stride1.1} parent=11 // pred_check_branch
        %264 = sbr.rel (%p262) target = $region32
      $region31: #{decoder_residual_stride1.1} parent=11 // pred_region
        _
      $region32: #{decoder_residual_stride1.1} parent=11 // pred_fallthru
        _
      // Predicated region
      $region33: #{decoder_residual_stride1.1} parent=11 // pred_check
        %p265 = pneg %p167
      $region34: #{decoder_residual_stride1.1} parent=11 // pred_check_branch
        %267 = sbr.rel (%p265) target = $region36
      $region35: #{decoder_residual_stride1.1} parent=11 // pred_region
        _
      $region36: #{decoder_residual_stride1.1} parent=11 // pred_fallthru
        _
      // Predicated region
      $region37: #{decoder_residual_stride1.1} parent=11 // pred_check
        %p268 = pneg %p188
      $region38: #{decoder_residual_stride1.1} parent=11 // pred_check_branch
        %270 = sbr.rel (%p268) target = $region40
      $region39: #{decoder_residual_stride1.1} parent=11 // pred_region
        _
      $region40: #{decoder_residual_stride1.1} parent=11 // pred_fallthru
        _
      // Predicated region
      $region41: #{decoder_residual_stride1.1} parent=11 // pred_check
        %p271 = pneg %p209
      $region42: #{decoder_residual_stride1.1} parent=11 // pred_check_branch
        %273 = sbr.rel (%p271) target = $region44
      $region43: #{decoder_residual_stride1.1} parent=11 // pred_region
        _
      $region44: #{decoder_residual_stride1.1} parent=11 // pred_fallthru
        _
    $region12: #{decoder_residual_stride1.1} parent=5 // pred_fallthru
      _
    %p274 = scmp.lt.s32.totalorder %s15, 2
    // Predicated region
    $region45: #{decoder_residual_stride1.1} parent=5 // pred_check
      %p275 = pneg %p274
    $region46: #{decoder_residual_stride1.1} parent=5 // pred_check_branch
      %277 = sbr.rel (%p275) target = $region48
    $region47: #{decoder_residual_stride1.1} parent=5 // pred_region
      // Predicated region
      $region49: #{decoder_residual_stride1.1} parent=47 // pred_check
        %p278 = pneg %p35
      $region50: #{decoder_residual_stride1.1} parent=47 // pred_check_branch
        %280 = sbr.rel (%p278) target = $region52
      $region51: #{decoder_residual_stride1.1} parent=47 // pred_region
        %p281 = scmp.lt.s32.totalorder %s15, 1
        %s282 = scalar_select %p281, %s15, 1
        %s283 = smul.addr %s282, 2
        %s284 = smul.addr %s283, 8
        %s285 = scalar_lea.vmem %s0, %s284
      $region52: #{decoder_residual_stride1.1} parent=47 // pred_fallthru
        _
    $region48: #{decoder_residual_stride1.1} parent=5 // pred_fallthru
      _
    %p286 = scmp.le.s32.totalorder 1, %s15
    %p287 = scmp.lt.s32.totalorder %s15, 3
    %p288 = pnand %p286, %p287
    %p289 = pneg %p288
    // Predicated region
    $region53: #{decoder_residual_stride1.1} parent=5 // pred_check
      _
    $region54: #{decoder_residual_stride1.1} parent=5 // pred_check_branch
      %291 = sbr.rel (%p288) target = $region56
    $region55: #{decoder_residual_stride1.1} parent=5 // pred_region
      %s292 = ssub.s32 %s15, 1
      %p293 = scmp.lt.s32.totalorder %s20, 1
      %s294 = scalar_select %p293, %s20, 1
      %s295 = smul.addr %s294, 2
      %s296 = smul.addr %s295, 8
      %s297 = scalar_lea.vmem %s0, %s296
      %p298 = pneg %p41
      %p299 = pneg %p38
      %p300 = pneg %p62
      %p301 = pneg %p59
      %p302 = pneg %p83
      %p303 = pneg %p80
      %p304 = pneg %p104
      %p305 = pneg %p101
      %p306 = pneg %p125
      %p307 = pneg %p122
      %p308 = pneg %p146
      %p309 = pneg %p143
      %p310 = pneg %p167
      %p311 = pneg %p164
      %p312 = pneg %p188
      %p313 = pneg %p185
      %p314 = pneg %p209
      %p315 = pneg %p206
      %p316 = pneg %p235
      %p317 = pneg %p232
      %p318 = scmp.lt.s32.totalorder %s20, 1
      %s319 = scalar_select %p318, %s20, 1
      %s320 = smul.addr %s319, 2
      %s321 = smul.addr %s320, 8
      %s322 = scalar_lea.vmem %s9, %s321
      %p323 = scmp.lt.s32.totalorder %s20, 1
      %s324 = scalar_select %p323, %s20, 1
      %s325 = smul.addr %s324, 2
      %s326 = smul.addr %s325, 8
      %s327 = scalar_lea.vmem %s0, %s326
      %p328 = scmp.lt.s32.totalorder %s20, 1
      %s329 = scalar_select %p328, %s20, 1
      %s330 = smul.addr %s329, 2
      %s331 = smul.addr %s330, 8
      %s332 = scalar_lea.vmem %s9, %s331
      %v333 = vld [vmem:[%s327] sm:$0xf0]
      %v334 = vld [vmem:[%s327 + $0x8] sm:$0xf0]
      %v335 = vld [vmem:[%s3] sm:$0xf]
      %v336 = vld [vmem:[%s4] sm:$0xf]
      %338 = vset.pattern.permute.xlu0 0
      %339 = vperm.xlu0 %338, %v335
      %v340 = vpop.permute.xlu0 %339
      %v342 = vlaneseq
      %v343 = vshrl.u32 %v342, 7
      %v344 = vsub.s32 4, %v343
      %v345 = vrot.slane %v333, %v344
      %v346 = vlaneseq
      %v347 = vshrl.u32 %v346, 7
      %v348 = vsub.s32 4, %v347
      %v349 = vrot.slane %v334, %v348
      %v350 = vmul.f32 %v340, %v345
      %v351 = vmul.f32 %v340, %v349
      %v352 = vadd.f32 %v350, 0.0
      %v353 = vadd.f32 %v351, 0.0
      %354 = vset.pattern.permute.xlu0 1
      %355 = vperm.xlu0 %354, %v335
      %v356 = vpop.permute.xlu0 %355
      %v358 = vlaneseq
      %v359 = vshrl.u32 %v358, 7
      %v360 = vsub.s32 5, %v359
      %v361 = vrot.slane %v333, %v360
      %v362 = vlaneseq
      %v363 = vshrl.u32 %v362, 7
      %v364 = vsub.s32 5, %v363
      %v365 = vrot.slane %v334, %v364
      %v366 = vmul.f32 %v356, %v361
      %v367 = vmul.f32 %v356, %v365
      %v368 = vadd.f32 %v352, %v366
      %v369 = vadd.f32 %v353, %v367
      %370 = vset.pattern.permute.xlu0 2
      %371 = vperm.xlu0 %370, %v335
      %v372 = vpop.permute.xlu0 %371
      %v374 = vlaneseq
      %v375 = vshrl.u32 %v374, 7
      %v376 = vsub.s32 6, %v375
      %v377 = vrot.slane %v333, %v376
      %v378 = vlaneseq
      %v379 = vshrl.u32 %v378, 7
      %v380 = vsub.s32 6, %v379
      %v381 = vrot.slane %v334, %v380
      %v382 = vmul.f32 %v372, %v377
      %v383 = vmul.f32 %v372, %v381
      %v384 = vadd.f32 %v368, %v382
      %v385 = vadd.f32 %v369, %v383
      %386 = vset.pattern.permute.xlu0 3
      %387 = vperm.xlu0 %386, %v335
      %v388 = vpop.permute.xlu0 %387
      %v390 = vlaneseq
      %v391 = vshrl.u32 %v390, 7
      %v392 = vsub.s32 7, %v391
      %v393 = vrot.slane %v333, %v392
      %v394 = vlaneseq
      %v395 = vshrl.u32 %v394, 7
      %v396 = vsub.s32 7, %v395
      %v397 = vrot.slane %v334, %v396
      %v398 = vmul.f32 %v388, %v393
      %v399 = vmul.f32 %v388, %v397
      %v400 = vadd.f32 %v384, %v398
      %v401 = vadd.f32 %v385, %v399
      %403 = vset.pattern.permute.xlu0 0
      %404 = vperm.xlu0 %403, %v336
      %v405 = vpop.permute.xlu0 %404
      %v407 = vadd.f32 %v400, %v405
      %v408 = vadd.f32 %v401, %v405
      %v409 = vmax.f32 %v407, 0.0
      %v410 = vmax.f32 %v408, 0.0
      %411 = vst [vmem:[#allocation2] sm:$0xf] 0.0
      %412 = vst [vmem:[#allocation2 + $0xc] sm:$0xf] 0.0
      %v415 = vcombine.low %v409, %v410
      %417 = vst [vmem:[#allocation2 + $0x4] sm:$0xff] %v415
      %v418 = vld [vmem:[%s1] sm:$0x3]
      %v419 = vld [vmem:[%s2] sm:$0x3]
      %v420 = vld [vmem:[#allocation2] sm:$0xff]
      %v421 = vld [vmem:[#allocation2 + $0x8] sm:$0xf]
      %v423 = vlaneseq
      %v424 = vshrl.u32 %v423, 7
      %v425 = vsub.s32 0, %v424
      %v426 = vrot.slane %v418, %v425
      %v427 = vlaneseq
      %v428 = vshrl.u32 %v427, 7
      %v429 = vsub.s32 1, %v428
      %v430 = vrot.slane %v418, %v429
      %v431 = vcombine.low %v426, %v430
      %432 = vrot.lane.b32.xlu0 %v431, 111
      %v433 = vpop.permute.xlu0 %432
      %v434 = vrot.slane %v433, 4
      %vm435 = vcmask 908288
      %v436 = vsel %vm435, %v434, %v433
      %v439 = vmul.f32 %v420, %v436
      %v440 = vmul.f32 %v421, %v434
      %v442 = vlaneseq
      %v443 = vshrl.u32 %v442, 7
      %v444 = vsub.s32 0, %v443
      %v445 = vrot.slane %v419, %v444
      %v446 = vlaneseq
      %v447 = vshrl.u32 %v446, 7
      %v448 = vsub.s32 1, %v447
      %v449 = vrot.slane %v419, %v448
      %v450 = vcombine.low %v445, %v449
      %451 = vrot.lane.b32.xlu0 %v450, 113
      %v452 = vpop.permute.xlu0 %451
      %v453 = vrot.slane %v452, 4
      %vm454 = vcmask 924672
      %v455 = vsel %vm454, %v453, %v452
      %v458 = vmul.f32 %v420, %v455
      %v459 = vmul.f32 %v421, %v453
      %460 = vrot.lane.b32.xlu0 %v431, 127
      %v461 = vpop.permute.xlu0 %460
      %v462 = vrot.slane %v461, 4
      %vm463 = vcmask 1039360
      %v464 = vsel %vm463, %v462, %v461
      %v467 = vmul.f32 %v420, %v464
      %v468 = vmul.f32 %v421, %v462
      %v469 = vld [vmem:[#allocation2 + $0x4] sm:$0xff]
      %v470 = vld [vmem:[#allocation2 + $0x4] sm:$0xff]
      %v471 = vld [vmem:[#allocation2 + $0xc] sm:$0xf]
      %472 = vrot.lane.b32.xlu0 %v450, 1
      %v473 = vpop.permute.xlu0 %472
      %v474 = vrot.slane %v473, 4
      %vm475 = vcmask 7168
      %v476 = vsel %vm475, %v474, %v473
      %v479 = vmul.f32 %v470, %v476
      %v480 = vmul.f32 %v471, %v474
      %481 = vrot.lane.b32.xlu0 %v431, 15
      %v482 = vpop.permute.xlu0 %481
      %v483 = vrot.slane %v482, 4
      %vm484 = vcmask 121856
      %v485 = vsel %vm484, %v483, %v482
      %v488 = vmul.f32 %v470, %v485
      %v489 = vmul.f32 %v471, %v483
      %490 = vrot.lane.b32.xlu0 %v450, 17
      %v491 = vpop.permute.xlu0 %490
      %v492 = vrot.slane %v491, 4
      %vm493 = vcmask 138240
      %v494 = vsel %vm493, %v492, %v491
      %v497 = vmul.f32 %v470, %v494
      %v498 = vmul.f32 %v471, %v492
      %v499 = vld [vmem:[%s5] sm:$0xf]
      %501 = vset.pattern.permute.xlu0 0
      %502 = vperm.xlu0 %501, %v499
      %v503 = vpop.permute.xlu0 %502
      %v507 = vcombine.high %v439, %v439
      %508 = vrot.lane.b32.xlu0 %v439, 17
      %v509 = vpop.permute.xlu0 %508
      %510 = vrot.lane.b32.xlu0 %v507, 17
      %v511 = vpop.permute.xlu0 %510
      %512 = vrot.lane.b32.xlu0 %v440, 17
      %v513 = vpop.permute.xlu0 %512
      %v514 = vsel %vm493, %v509, %v511
      %v515 = vsel %vm493, %v511, %v513
      %v518 = vmul.f32 %v503, %v514
      %v519 = vmul.f32 %v503, %v515
      %v520 = vadd.f32 %v518, 0.0
      %v521 = vadd.f32 %v519, 0.0
      %522 = vset.pattern.permute.xlu0 1
      %523 = vperm.xlu0 %522, %v499
      %v524 = vpop.permute.xlu0 %523
      %v528 = vcombine.high %v420, %v420
      %529 = vrot.lane.b32.xlu0 %v420, 16
      %v530 = vpop.permute.xlu0 %529
      %531 = vrot.lane.b32.xlu0 %v528, 16
      %v532 = vpop.permute.xlu0 %531
      %533 = vrot.lane.b32.xlu0 %v421, 16
      %v534 = vpop.permute.xlu0 %533
      %vm535 = vcmask 130048
      %v536 = vsel %vm535, %v530, %v532
      %v537 = vsel %vm535, %v532, %v534
      %v540 = vmul.f32 %v524, %v536
      %v541 = vmul.f32 %v524, %v537
      %v542 = vadd.f32 %v520, %v540
      %v543 = vadd.f32 %v521, %v541
      %544 = vset.pattern.permute.xlu0 2
      %545 = vperm.xlu0 %544, %v499
      %v546 = vpop.permute.xlu0 %545
      %v550 = vcombine.high %v458, %v458
      %551 = vrot.lane.b32.xlu0 %v458, 15
      %v552 = vpop.permute.xlu0 %551
      %553 = vrot.lane.b32.xlu0 %v550, 15
      %v554 = vpop.permute.xlu0 %553
      %555 = vrot.lane.b32.xlu0 %v459, 15
      %v556 = vpop.permute.xlu0 %555
      %v557 = vsel %vm484, %v552, %v554
      %v558 = vsel %vm484, %v554, %v556
      %v561 = vmul.f32 %v546, %v557
      %v562 = vmul.f32 %v546, %v558
      %v563 = vadd.f32 %v542, %v561
      %v564 = vadd.f32 %v543, %v562
      %565 = vset.pattern.permute.xlu0 3
      %566 = vperm.xlu0 %565, %v499
      %v567 = vpop.permute.xlu0 %566
      %v571 = vcombine.high %v467, %v467
      %572 = vrot.lane.b32.xlu0 %v467, 1
      %v573 = vpop.permute.xlu0 %572
      %574 = vrot.lane.b32.xlu0 %v571, 1
      %v575 = vpop.permute.xlu0 %574
      %576 = vrot.lane.b32.xlu0 %v468, 1
      %v577 = vpop.permute.xlu0 %576
      %v578 = vsel %vm475, %v573, %v575
      %v579 = vsel %vm475, %v575, %v577
      %v582 = vmul.f32 %v567, %v578
      %v583 = vmul.f32 %v567, %v579
      %v584 = vadd.f32 %v563, %v582
      %v585 = vadd.f32 %v564, %v583
      %586 = vset.pattern.permute.xlu0 4
      %587 = vperm.xlu0 %586, %v499
      %v588 = vpop.permute.xlu0 %587
      %v591 = vcombine.high %v469, %v469
      %v593 = vmul.f32 %v588, %v469
      %v594 = vmul.f32 %v588, %v591
      %v595 = vadd.f32 %v584, %v593
      %v596 = vadd.f32 %v585, %v594
      %597 = vset.pattern.permute.xlu0 5
      %598 = vperm.xlu0 %597, %v499
      %v599 = vpop.permute.xlu0 %598
      %v603 = vcombine.high %v479, %v479
      %604 = vrot.lane.b32.xlu0 %v479, 127
      %v605 = vpop.permute.xlu0 %604
      %606 = vrot.lane.b32.xlu0 %v603, 127
      %v607 = vpop.permute.xlu0 %606
      %608 = vrot.lane.b32.xlu0 %v480, 127
      %v609 = vpop.permute.xlu0 %608
      %v610 = vsel %vm463, %v605, %v607
      %v611 = vsel %vm463, %v607, %v609
      %v614 = vmul.f32 %v599, %v610
      %v615 = vmul.f32 %v599, %v611
      %v616 = vadd.f32 %v595, %v614
      %v617 = vadd.f32 %v596, %v615
      %618 = vset.pattern.permute.xlu0 6
      %619 = vperm.xlu0 %618, %v499
      %v620 = vpop.permute.xlu0 %619
      %v624 = vcombine.high %v488, %v488
      %625 = vrot.lane.b32.xlu0 %v488, 113
      %v626 = vpop.permute.xlu0 %625
      %627 = vrot.lane.b32.xlu0 %v624, 113
      %v628 = vpop.permute.xlu0 %627
      %629 = vrot.lane.b32.xlu0 %v489, 113
      %v630 = vpop.permute.xlu0 %629
      %v631 = vsel %vm454, %v626, %v628
      %v632 = vsel %vm454, %v628, %v630
      %v635 = vmul.f32 %v620, %v631
      %v636 = vmul.f32 %v620, %v632
      %v637 = vadd.f32 %v616, %v635
      %v638 = vadd.f32 %v617, %v636
      %639 = vset.pattern.permute.xlu0 7
      %640 = vperm.xlu0 %639, %v499
      %v641 = vpop.permute.xlu0 %640
      %v645 = vcombine.high %v470, %v470
      %646 = vrot.lane.b32.xlu0 %v470, 112
      %v647 = vpop.permute.xlu0 %646
      %648 = vrot.lane.b32.xlu0 %v645, 112
      %v649 = vpop.permute.xlu0 %648
      %650 = vrot.lane.b32.xlu0 %v471, 112
      %v651 = vpop.permute.xlu0 %650
      %vm652 = vcmask 916480
      %v653 = vsel %vm652, %v647, %v649
      %v654 = vsel %vm652, %v649, %v651
      %v657 = vmul.f32 %v641, %v653
      %v658 = vmul.f32 %v641, %v654
      %v659 = vadd.f32 %v637, %v657
      %v660 = vadd.f32 %v638, %v658
      %661 = vset.pattern.permute.xlu0 8
      %662 = vperm.xlu0 %661, %v499
      %v663 = vpop.permute.xlu0 %662
      %v667 = vcombine.high %v497, %v497
      %668 = vrot.lane.b32.xlu0 %v497, 111
      %v669 = vpop.permute.xlu0 %668
      %670 = vrot.lane.b32.xlu0 %v667, 111
      %v671 = vpop.permute.xlu0 %670
      %672 = vrot.lane.b32.xlu0 %v498, 111
      %v673 = vpop.permute.xlu0 %672
      %v674 = vsel %vm435, %v669, %v671
      %v675 = vsel %vm435, %v671, %v673
      %v678 = vmul.f32 %v663, %v674
      %v679 = vmul.f32 %v663, %v675
      %v680 = vadd.f32 %v659, %v678
      %v681 = vadd.f32 %v660, %v679
      %v682 = vld [vmem:[%s6] sm:$0xf]
      %684 = vset.pattern.permute.xlu0 0
      %685 = vperm.xlu0 %684, %v682
      %v686 = vpop.permute.xlu0 %685
      %v688 = vadd.f32 %v680, %v686
      %v689 = vadd.f32 %v681, %v686
      %v690 = vld [vmem:[%s7] sm:$0xf]
      %v691 = vld [vmem:[%s8] sm:$0xf]
      %693 = vset.pattern.permute.xlu0 0
      %694 = vperm.xlu0 %693, %v690
      %v695 = vpop.permute.xlu0 %694
      %v697 = vlaneseq
      %v698 = vshrl.u32 %v697, 7
      %v699 = vsub.s32 0, %v698
      %v700 = vrot.slane %v688, %v699
      %v701 = vlaneseq
      %v702 = vshrl.u32 %v701, 7
      %v703 = vsub.s32 0, %v702
      %v704 = vrot.slane %v689, %v703
      %v705 = vmul.f32 %v695, %v700
      %v706 = vmul.f32 %v695, %v704
      %v707 = vadd.f32 %v705, 0.0
      %v708 = vadd.f32 %v706, 0.0
      %709 = vset.pattern.permute.xlu0 1
      %710 = vperm.xlu0 %709, %v690
      %v711 = vpop.permute.xlu0 %710
      %v713 = vlaneseq
      %v714 = vshrl.u32 %v713, 7
      %v715 = vsub.s32 1, %v714
      %v716 = vrot.slane %v688, %v715
      %v717 = vlaneseq
      %v718 = vshrl.u32 %v717, 7
      %v719 = vsub.s32 1, %v718
      %v720 = vrot.slane %v689, %v719
      %v721 = vmul.f32 %v711, %v716
      %v722 = vmul.f32 %v711, %v720
      %v723 = vadd.f32 %v707, %v721
      %v724 = vadd.f32 %v708, %v722
      %725 = vset.pattern.permute.xlu0 2
      %726 = vperm.xlu0 %725, %v690
      %v727 = vpop.permute.xlu0 %726
      %v729 = vlaneseq
      %v730 = vshrl.u32 %v729, 7
      %v731 = vsub.s32 2, %v730
      %v732 = vrot.slane %v688, %v731
      %v733 = vlaneseq
      %v734 = vshrl.u32 %v733, 7
      %v735 = vsub.s32 2, %v734
      %v736 = vrot.slane %v689, %v735
      %v737 = vmul.f32 %v727, %v732
      %v738 = vmul.f32 %v727, %v736
      %v739 = vadd.f32 %v723, %v737
      %v740 = vadd.f32 %v724, %v738
      %741 = vset.pattern.permute.xlu0 3
      %742 = vperm.xlu0 %741, %v690
      %v743 = vpop.permute.xlu0 %742
      %v745 = vlaneseq
      %v746 = vshrl.u32 %v745, 7
      %v747 = vsub.s32 3, %v746
      %v748 = vrot.slane %v688, %v747
      %v749 = vlaneseq
      %v750 = vshrl.u32 %v749, 7
      %v751 = vsub.s32 3, %v750
      %v752 = vrot.slane %v689, %v751
      %v753 = vmul.f32 %v743, %v748
      %v754 = vmul.f32 %v743, %v752
      %v755 = vadd.f32 %v739, %v753
      %v756 = vadd.f32 %v740, %v754
      %758 = vset.pattern.permute.xlu0 0
      %759 = vperm.xlu0 %758, %v691
      %v760 = vpop.permute.xlu0 %759
      %v762 = vadd.f32 %v755, %v760
      %v763 = vadd.f32 %v756, %v760
      %v764 = vmax.f32 %v762, 0.0
      %v765 = vmax.f32 %v763, 0.0
      %v766 = vld [vmem:[%s327] ss:$8 sm:$0x3]
      %v767 = vlaneseq
      %vm768 = vcmp.ge.s32.totalorder %v767, 0
      %vm769 = vcmp.lt.s32.totalorder %v767, 256
      %vm770 = vmand %vm768, %vm769
      %771 = vst.msk [vmem:[%s332] ss:$8 sm:$0x3] %vm770, %v766
      %772 = vst.msk [vmem:[%s332] ss:$8 sm:$0x0] %vm770, %v766
      %v775 = vcombine.low %v764, %v765
      %v777 = vunpack.c.l.s4 1966171168
      %v778 = vunpack.c.0.s8 %v777
      %v779 = vlaneseq
      %v780 = vshrl.u32 %v779, 7
      %v781 = vsub.s32 %v778, %v780
      %v782 = vrot.slane %v775, %v781
      %v784 = vunpack.c.l.s4 1966171168
      %v785 = vunpack.c.0.s8 %v784
      %v786 = vlaneseq
      %v787 = vshrl.u32 %v786, 7
      %v788 = vsub.s32 %v785, %v787
      %v789 = vrot.slane %v782, %v788
      %s791 = scalar_lea.vmem %s332, 1
      %792 = vst.msk [vmem:[%s791] ss:$8 sm:$0x3] %vm770, %v789
      %793 = vst.msk [vmem:[%s791] ss:$8 sm:$0x0] %vm770, %v789
      %s794 = scalar_lea.vmem %s327, 1
      %v795 = vld [vmem:[%s794] ss:$8 sm:$0x3]
      %s796 = scalar_lea.vmem %s332, 2
      %797 = vst.msk [vmem:[%s796] ss:$8 sm:$0x3] %vm770, %v795
      %798 = vst.msk [vmem:[%s796] ss:$8 sm:$0x0] %vm770, %v795
      %v799 = vcombine.high %v782, %v782
      %v801 = vunpack.c.l.s4 1966171168
      %v802 = vunpack.c.0.s8 %v801
      %v803 = vlaneseq
      %v804 = vshrl.u32 %v803, 7
      %v805 = vsub.s32 %v802, %v804
      %v806 = vrot.slane %v799, %v805
      %s808 = scalar_lea.vmem %s332, 3
      %809 = vst.msk [vmem:[%s808] ss:$8 sm:$0x3] %vm770, %v806
      %810 = vst.msk [vmem:[%s808] ss:$8 sm:$0x0] %vm770, %v806
      %s811 = scalar_lea.vmem %s327, 2
      %v812 = vld [vmem:[%s811] ss:$8 sm:$0x3]
      %s813 = scalar_lea.vmem %s332, 4
      %814 = vst.msk [vmem:[%s813] ss:$8 sm:$0x3] %vm770, %v812
      %815 = vst.msk [vmem:[%s813] ss:$8 sm:$0x0] %vm770, %v812
      %v816 = vcombine.high %v789, %v789
      %s818 = scalar_lea.vmem %s332, 5
      %819 = vst.msk [vmem:[%s818] ss:$8 sm:$0x3] %vm770, %v816
      %820 = vst.msk [vmem:[%s818] ss:$8 sm:$0x0] %vm770, %v816
      %s821 = scalar_lea.vmem %s327, 3
      %v822 = vld [vmem:[%s821] ss:$8 sm:$0x3]
      %s823 = scalar_lea.vmem %s332, 6
      %824 = vst.msk [vmem:[%s823] ss:$8 sm:$0x3] %vm770, %v822
      %825 = vst.msk [vmem:[%s823] ss:$8 sm:$0x0] %vm770, %v822
      %v826 = vcombine.high %v806, %v806
      %s828 = scalar_lea.vmem %s332, 7
      %829 = vst.msk [vmem:[%s828] ss:$8 sm:$0x3] %vm770, %v826
      %830 = vst.msk [vmem:[%s828] ss:$8 sm:$0x0] %vm770, %v826
      %p831 = scmp.lt.s32.totalorder %s20, 1
      %s832 = scalar_select %p831, %s20, 1
      %s833 = smul.addr %s832, 2
      %s834 = smul.addr %s833, 8
      %s835 = scalar_lea.vmem %s9, %s834
      // Predicated region
      $region57: #{decoder_residual_stride1.1} parent=55 // pred_check
        %p836 = pneg %p232
      $region58: #{decoder_residual_stride1.1} parent=55 // pred_check_branch
        %838 = sbr.rel (%p836) target = $region60
      $region59: #{decoder_residual_stride1.1} parent=55 // pred_region
        _
      $region60: #{decoder_residual_stride1.1} parent=55 // pred_fallthru
        _
    $region56: #{decoder_residual_stride1.1} parent=5 // pred_fallthru
      _
    %p839 = scmp.le.s32.totalorder 2, %s15
    // Predicated region
    $region61: #{decoder_residual_stride1.1} parent=5 // pred_check
      %p840 = pneg %p839
    $region62: #{decoder_residual_stride1.1} parent=5 // pred_check_branch
      %842 = sbr.rel (%p840) target = $region64
    $region63: #{decoder_residual_stride1.1} parent=5 // pred_region
      %s843 = ssub.s32 %s15, 2
      // Predicated region
      $region65: #{decoder_residual_stride1.1} parent=63 // pred_check
        %p844 = pneg %p238
      $region66: #{decoder_residual_stride1.1} parent=63 // pred_check_branch
        %846 = sbr.rel (%p844) target = $region68
      $region67: #{decoder_residual_stride1.1} parent=63 // pred_region
        %p847 = scmp.lt.s32.totalorder %s21, 1
        %s848 = scalar_select %p847, %s21, 1
        %s849 = smul.addr %s848, 2
        %s850 = smul.addr %s849, 8
        %s851 = scalar_lea.vmem %s9, %s850
      $region68: #{decoder_residual_stride1.1} parent=63 // pred_fallthru
        _
    $region64: #{decoder_residual_stride1.1} parent=5 // pred_fallthru
      _
  $region6: #{decoder_residual_stride1.1} parent=0 // loop_footer
    %s19 = sadd.s32 1, %s15
  $region7: #{decoder_residual_stride1.1} parent=0 // loop_footer_branch
    %14 = sbr.rel target = $region3
  $region8: #{decoder_residual_stride1.1} parent=0 // loop_exit
    _

</llo_original>
